<compile_context>
chip_gen: v6e
topology: v6e:2x2x1
jax: 0.10.0
libtpu: 0.0.40
codegen_flags: <defaults>
</compile_context>

<pallas_src>
import jax
import jax.numpy as jnp
from jax.experimental import pallas as pl
from jax.experimental.pallas import tpu as pltpu


def _round_up(x, m):
    return ((x + m - 1) // m) * m


def fm_kernel(x_ref, rhs_ref, v2_ref, b_ref, o_ref):
    """FM forward for one batch tile.

    x_ref:   (TB, n)     batch tile
    rhs_ref: (n, k + 1)  concat([V, W^T], axis=1)  (resident)
    v2_ref:  (1, n)      rowsum(V^2, axis=1)^T     (resident)
    b_ref:   (1, 1)      linear bias               (resident)
    o_ref:   (TB, 1)
    """
    x = x_ref[...]                                   # (TB, n), native dtype
    rhs = rhs_ref[...]                               # (n, k+1)
    v2 = v2_ref[...]                                 # (1, n)
    b = b_ref[...]                                   # (1, 1)

    k = rhs_ref.shape[1] - 1

    # Single fused MXU pass: [x@V | x@W^T], f32 accumulation.
    xr = jnp.dot(x, rhs, preferred_element_type=jnp.float32)     # (TB, k+1)

    # out_1 = sum_k (xV)^2
    xv = xr[:, :k]
    out_1 = jnp.sum(xv * xv, axis=1, keepdims=True)               # (TB, 1)

    # out_2 = x^2 @ rowsum(V^2)  -> VPU multiply + lane reduce (no 2nd matmul)
    out_2 = jnp.sum((x * x) * v2, axis=1, keepdims=True)          # (TB, 1)

    # linear term
    out_lin = xr[:, k:k + 1] + b                                  # (TB, 1)

    o_ref[...] = (0.5 * (out_1 - out_2) + out_lin).astype(o_ref.dtype)


def torch_fm_forward(x, V, W, b, tb=1024):
    """Pallas wrapper. x: (B, n), V: (n, k), W: (1, n), b: (1, 1) -> (B, 1)."""
    B, n = x.shape
    k = V.shape[1]

    # Weights-only precompute (done once, outside the batch-tiled grid).
    rhs = jnp.concatenate([V, jnp.transpose(W)], axis=1)           # (n, k+1)
    v2sum = jnp.transpose(jnp.sum(jnp.square(V), axis=1,
                                  keepdims=True))                  # (1, n)

    # Batch tile: multiple of 8 sublanes, capped at tb; pad B up to a multiple.
    TB = min(tb, _round_up(B, 8))
    B_pad = _round_up(B, TB)
    x_p = x if B_pad == B else jnp.pad(x, ((0, B_pad - B), (0, 0)))
    grid = (B_pad // TB,)

    out = pl.pallas_call(
        fm_kernel,
        out_shape=jax.ShapeDtypeStruct((B_pad, 1), jnp.float32),
        grid_spec=pltpu.PrefetchScalarGridSpec(
            num_scalar_prefetch=0,
            grid=grid,
            in_specs=[
                pl.BlockSpec((TB, n), lambda i: (i, 0)),       # x: streamed
                pl.BlockSpec((n, k + 1), lambda i: (0, 0)),    # RHS: resident
                pl.BlockSpec((1, n), lambda i: (0, 0)),        # rowsum(V^2)
                pl.BlockSpec((1, 1), lambda i: (0, 0)),        # bias
            ],
            out_specs=pl.BlockSpec((TB, 1), lambda i: (i, 0)),
        ),
        compiler_params=pltpu.CompilerParams(
            dimension_semantics=("parallel",),
        ),
    )(x_p, rhs, v2sum, b)
    return out[:B]


def reference_fm(x, V, W, b):
    """Pure-JAX reference mirroring the PyTorch forward exactly."""
    out_1 = jnp.sum(jnp.square(x @ V), axis=1, keepdims=True)
    out_2 = jnp.sum(jnp.square(x) @ jnp.square(V), axis=1, keepdims=True)
    out_inter = 0.5 * (out_1 - out_2)
    out_lin = x @ W.T + b
    return out_inter + out_lin


if __name__ == "__main__":
    key = jax.random.PRNGKey(0)
    kx, kv, kw, kb, kx2 = jax.random.split(key, 5)

    # Small, deterministic problem: batch=8 samples, n=32 features, k=8 factors.
    B, n, k = 8, 32, 8
    x = jax.random.normal(kx, (B, n), dtype=jnp.float32)

    # V ~ randn(n, k) as in the module's __init__.
    V = jax.random.normal(kv, (n, k), dtype=jnp.float32)

    # nn.Linear(n, 1) default init: uniform(-1/sqrt(n), 1/sqrt(n)) for W and b.
    bound = 1.0 / jnp.sqrt(jnp.float32(n))
    W = jax.random.uniform(kw, (1, n), minval=-bound, maxval=bound,
                           dtype=jnp.float32)
    b = jax.random.uniform(kb, (1, 1), minval=-bound, maxval=bound,
                           dtype=jnp.float32)

    out = jax.block_until_ready(torch_fm_forward(x, V, W, b))
    ref = reference_fm(x, V, W, b)
    assert out.shape == (B, 1), out.shape
    assert jnp.allclose(out, ref, atol=1e-4, rtol=1e-4), (
        f"max abs err {jnp.max(jnp.abs(out - ref))}"
    )

    # Second check: batch not a multiple of the tile and multiple grid steps,
    # to exercise padding + the batch-tiled pipeline.
    B2 = 200
    x2 = jax.random.normal(kx2, (B2, n), dtype=jnp.float32)
    out2 = jax.block_until_ready(torch_fm_forward(x2, V, W, b, tb=64))
    ref2 = reference_fm(x2, V, W, b)
    assert out2.shape == (B2, 1), out2.shape
    assert jnp.allclose(out2, ref2, atol=1e-4, rtol=1e-4), (
        f"max abs err {jnp.max(jnp.abs(out2 - ref2))}"
    )

    print("KERNEL_OK")
</pallas_src>

<mosaic_0001>
module attributes {stable_mosaic.version = 11 : i64} {
  func.func @fm_kernel(%arg0: i32, %arg1: memref<8x32xf32, #tpu.memory_space<vmem>>, %arg2: memref<32x9xf32, #tpu.memory_space<vmem>>, %arg3: memref<1x32xf32, #tpu.memory_space<vmem>>, %arg4: memref<1x1xf32, #tpu.memory_space<vmem>>, %arg5: memref<8x1xf32, #tpu.memory_space<vmem>>) attributes {dimension_semantics = [#tpu.dimension_semantics<parallel>], iteration_bounds = array<i64: 1>, scalar_prefetch = 0 : i64, scratch_operands = 0 : i64, tpu.core_type = #tpu.core_type<tc>, window_params = [{transform_indices = @transform_0, window_bounds = array<i64: 8, 32>}, {pipeline_mode = #tpu.pipeline_mode<synchronous>, transform_indices = @transform_1, window_bounds = array<i64: 32, 9>}, {pipeline_mode = #tpu.pipeline_mode<synchronous>, transform_indices = @transform_2, window_bounds = array<i64: 1, 32>}, {pipeline_mode = #tpu.pipeline_mode<synchronous>, transform_indices = @transform_3, window_bounds = array<i64: 1, 1>}, {transform_indices = @transform_4, window_bounds = array<i64: 8, 1>}]} {
    %c0 = arith.constant 0 : index
    %c0_0 = arith.constant 0 : index
    %0 = vector.load %arg1[%c0, %c0_0] : memref<8x32xf32, #tpu.memory_space<vmem>>, vector<8x32xf32>
    %c0_1 = arith.constant 0 : index
    %c0_2 = arith.constant 0 : index
    %1 = vector.load %arg2[%c0_1, %c0_2] : memref<32x9xf32, #tpu.memory_space<vmem>>, vector<32x9xf32>
    %c0_3 = arith.constant 0 : index
    %c0_4 = arith.constant 0 : index
    %2 = vector.load %arg3[%c0_3, %c0_4] : memref<1x32xf32, #tpu.memory_space<vmem>>, vector<1x32xf32>
    %c0_5 = arith.constant 0 : index
    %c0_6 = arith.constant 0 : index
    %3 = vector.load %arg4[%c0_5, %c0_6] : memref<1x1xf32, #tpu.memory_space<vmem>>, vector<1x1xf32>
    %cst = arith.constant dense<0.000000e+00> : vector<8x9xf32>
    %4 = tpu.matmul %0, %1, %cst {dimension_numbers = #tpu.dot_dimension_numbers<[1], [0], [0], [1], [0, 0, 1, 1], [], []>} : vector<8x32xf32>, vector<32x9xf32>, vector<8x9xf32> -> vector<8x9xf32>
    %5 = vector.extract_strided_slice %4 {offsets = [0, 0], sizes = [8, 8], strides = [1, 1]} : vector<8x9xf32> to vector<8x8xf32>
    %6 = arith.mulf %5, %5 : vector<8x8xf32>
    %cst_7 = arith.constant dense<0.000000e+00> : vector<8xf32>
    %7 = vector.multi_reduction <add>, %6, %cst_7 [1] : vector<8x8xf32> to vector<8xf32>
    %8 = vector.shape_cast %7 : vector<8xf32> to vector<8x1xf32>
    %9 = arith.mulf %0, %0 : vector<8x32xf32>
    %10 = vector.broadcast %2 : vector<1x32xf32> to vector<8x32xf32>
    %11 = arith.mulf %9, %10 : vector<8x32xf32>
    %cst_8 = arith.constant dense<0.000000e+00> : vector<8xf32>
    %12 = vector.multi_reduction <add>, %11, %cst_8 [1] : vector<8x32xf32> to vector<8xf32>
    %13 = vector.shape_cast %12 : vector<8xf32> to vector<8x1xf32>
    %14 = vector.extract_strided_slice %4 {offsets = [0, 8], sizes = [8, 1], strides = [1, 1]} : vector<8x9xf32> to vector<8x1xf32>
    %15 = vector.broadcast %3 : vector<1x1xf32> to vector<8x1xf32>
    %16 = arith.addf %14, %15 : vector<8x1xf32>
    %17 = arith.subf %8, %13 : vector<8x1xf32>
    %cst_9 = arith.constant 5.000000e-01 : f32
    %18 = vector.broadcast %cst_9 : f32 to vector<8x1xf32>
    %19 = arith.mulf %18, %17 : vector<8x1xf32>
    %20 = arith.addf %19, %16 : vector<8x1xf32>
    %c0_10 = arith.constant 0 : index
    %c0_11 = arith.constant 0 : index
    %21 = vector.load %arg5[%c0_10, %c0_11] : memref<8x1xf32, #tpu.memory_space<vmem>>, vector<8x1xf32>
    tpu.vector_store %arg5[%c0_10, %c0_11], %20 {strides = array<i32>} : memref<8x1xf32, #tpu.memory_space<vmem>>, vector<8x1xf32>,
    return
  }
  func.func @transform_0(%arg0: i32) -> (i32, i32) {
    %c0_i32 = arith.constant 0 : i32
    %c0_i32_0 = arith.constant 0 : i32
    return %arg0, %c0_i32 : i32, i32
  }
  func.func @transform_1(%arg0: i32) -> (i32, i32) {
    %c0_i32 = arith.constant 0 : i32
    %c0_i32_0 = arith.constant 0 : i32
    %c0_i32_1 = arith.constant 0 : i32
    return %c0_i32, %c0_i32_0 : i32, i32
  }
  func.func @transform_2(%arg0: i32) -> (i32, i32) {
    %c0_i32 = arith.constant 0 : i32
    %c0_i32_0 = arith.constant 0 : i32
    %c0_i32_1 = arith.constant 0 : i32
    return %c0_i32, %c0_i32_0 : i32, i32
  }
  func.func @transform_3(%arg0: i32) -> (i32, i32) {
    %c0_i32 = arith.constant 0 : i32
    %c0_i32_0 = arith.constant 0 : i32
    %c0_i32_1 = arith.constant 0 : i32
    return %c0_i32, %c0_i32_0 : i32, i32
  }
  func.func @transform_4(%arg0: i32) -> (i32, i32) {
    %c0_i32 = arith.constant 0 : i32
    %c0_i32_0 = arith.constant 0 : i32
    return %arg0, %c0_i32 : i32, i32
  }
}

</mosaic_0001>

<llo_original>
// kernel: tpu_custom_call.1
$region0: #{tpu_custom_call.1}
  #allocation0 [shape = 'u32[]', space=smem, size = 0x4, offset = 0x4, fixed_abs, tag = 'smem constant byte address 0x4 - core index']
  #allocation1 [shape = 'u32[144,128]{1,0:T(1,128)}', space=vmem, size = 0x12000, scoped, tag = 'internal scratch']
  #allocation2 [shape = 'f32[1,1]{1,0:T(1,128)S(1)}', space=vmem, size = 0x200, scoped, tag = 'scoped memory for tpu_custom_call.1']
  %s0 = inlined_call_operand.vmem [shape: f32[8,32], index: 0, kind: input, shape index: {}]
  %s1 = inlined_call_operand.vmem [shape: f32[32,9], index: 1, kind: input, shape index: {}]
  %s2 = inlined_call_operand.vmem [shape: f32[1,32], index: 2, kind: input, shape index: {}]
  %s3 = inlined_call_operand.<no memory space> [shape: f32[1,1], index: 3, kind: input, shape index: {}]
  %s4 = inlined_call_operand.vmem [shape: f32[8,1], index: 4, kind: output, shape index: {}]
  %s5 = sld [smem:[#allocation0]]
  $region26: #{tpu_custom_call.1} parent=0
    _
  %s7 = ssub.s32 1, %s5
  %s8 = scalar_select 0, %s7, %s5
  %v9 = vstv %s3
  %10 = vst [vmem:[#allocation2] sm:$0x1] %v9
  // Predicated region
  $region2: #{tpu_custom_call.1} parent=0 // pred_check
    _
  $region3: #{tpu_custom_call.1} parent=0 // pred_check_branch
    %12 = sbr.rel (0) target = $region5
  $region4: #{tpu_custom_call.1} parent=0 // pred_region
    _
  $region5: #{tpu_custom_call.1} parent=0 // pred_fallthru
    _
  // Predicated region
  $region6: #{tpu_custom_call.1} parent=0 // pred_check
    _
  $region7: #{tpu_custom_call.1} parent=0 // pred_check_branch
    %14 = sbr.rel (0) target = $region9
  $region8: #{tpu_custom_call.1} parent=0 // pred_region
    _
  $region9: #{tpu_custom_call.1} parent=0 // pred_fallthru
    _
  // Predicated region
  $region10: #{tpu_custom_call.1} parent=0 // pred_check
    _
  $region11: #{tpu_custom_call.1} parent=0 // pred_check_branch
    %16 = sbr.rel (0) target = $region13
  $region12: #{tpu_custom_call.1} parent=0 // pred_region
    _
  $region13: #{tpu_custom_call.1} parent=0 // pred_fallthru
    _
  // Predicated region
  $region14: #{tpu_custom_call.1} parent=0 // pred_check
    _
  $region15: #{tpu_custom_call.1} parent=0 // pred_check_branch
    %18 = sbr.rel (0) target = $region17
  $region16: #{tpu_custom_call.1} parent=0 // pred_region
    _
  $region17: #{tpu_custom_call.1} parent=0 // pred_fallthru
    _
  %v19 = vld [vmem:[%s0] sm:$0xff]
  %v20 = vld [vmem:[%s1] sm:$0xff]
  %v21 = vld [vmem:[%s1 + $0x8] sm:$0xff]
  %v22 = vld [vmem:[%s1 + $0x10] sm:$0xff]
  %v23 = vld [vmem:[%s1 + $0x18] sm:$0xff]
  %v24 = vld [vmem:[%s2] sm:$0x1]
  %v25 = vld [vmem:[#allocation2] sm:$0x1]
  %vm26 = vcmask 261120
  %v28 = vsel %vm26, %v19, 0
  %30 = vmatprep.subr.mxu0 0.0
  %31 = vmatpush1.msra.mxu0 0.0
  %32 = vmatprep.subr.mxu0 0.0
  %33 = vmatpush1.msra.mxu0 0.0
  %34 = vmatprep.subr.mxu0 0.0
  %35 = vmatpush1.msra.mxu0 0.0
  %36 = vmatprep.subr.mxu0 0.0
  %37 = vmatpush1.msra.mxu0 0.0
  %38 = vmatprep.subr.mxu0 0.0
  %39 = vmatpush1.msra.mxu0 0.0
  %40 = vmatprep.subr.mxu0 0.0
  %41 = vmatpush1.msra.mxu0 0.0
  %42 = vmatprep.subr.mxu0 0.0
  %43 = vmatpush1.msra.mxu0 0.0
  %44 = vmatprep.subr.mxu0 0.0
  %45 = vmatpush1.msra.mxu0 0.0
  %46 = vmatprep.subr.mxu0 0.0
  %47 = vmatpush1.msra.mxu0 0.0
  %48 = vmatprep.subr.mxu0 0.0
  %49 = vmatpush1.msra.mxu0 0.0
  %50 = vmatprep.subr.mxu0 0.0
  %51 = vmatpush1.msra.mxu0 0.0
  %52 = vmatprep.subr.mxu0 0.0
  %53 = vmatpush1.msra.mxu0 0.0
  %54 = vmatprep.subr.mxu0 0.0
  %55 = vmatpush1.msra.mxu0 %v23
  %56 = vmatprep.subr.mxu0 0.0
  %57 = vmatpush1.msra.mxu0 %v22
  %58 = vmatprep.subr.mxu0 0.0
  %59 = vmatpush1.msra.mxu0 %v21
  %60 = vmatprep.subr.mxu0 0.0
  %61 = vmatpush1.msra.mxu0 %v20
  %62 = vmatprep.subr.mxu0 0.0
  %63 = vmatpush2.msra.mxu0 0.0
  %64 = vmatprep.subr.mxu0 0.0
  %65 = vmatpush2.msra.mxu0 0.0
  %66 = vmatprep.subr.mxu0 0.0
  %67 = vmatpush2.msra.mxu0 0.0
  %68 = vmatprep.subr.mxu0 0.0
  %69 = vmatpush2.msra.mxu0 0.0
  %70 = vmatprep.subr.mxu0 0.0
  %71 = vmatpush2.msra.mxu0 0.0
  %72 = vmatprep.subr.mxu0 0.0
  %73 = vmatpush2.msra.mxu0 0.0
  %74 = vmatprep.subr.mxu0 0.0
  %75 = vmatpush2.msra.mxu0 0.0
  %76 = vmatprep.subr.mxu0 0.0
  %77 = vmatpush2.msra.mxu0 0.0
  %78 = vmatprep.subr.mxu0 0.0
  %79 = vmatpush2.msra.mxu0 0.0
  %80 = vmatprep.subr.mxu0 0.0
  %81 = vmatpush2.msra.mxu0 0.0
  %82 = vmatprep.subr.mxu0 0.0
  %83 = vmatpush2.msra.mxu0 0.0
  %84 = vmatprep.subr.mxu0 0.0
  %85 = vmatpush2.msra.mxu0 0.0
  %86 = vmatprep.subr.mxu0 0.0
  %87 = vmatpush2.msra.mxu0 0.0
  %88 = vmatprep.subr.mxu0 0.0
  %89 = vmatpush2.msra.mxu0 0.0
  %90 = vmatprep.subr.mxu0 0.0
  %91 = vmatpush2.msra.mxu0 0.0
  %92 = vmatprep.subr.mxu0 0.0
  %93 = vmatpush2.msra.mxu0 0.0
  %94 = vmatprep.mubr.f32.mxu0 0.0
  %95 = vmatmul.mubr.f32.gmra.mxu0 %v28
  %v96 = vpop.f32.mrf.mxu0
  %v97 = vadd.f32 0.0, %v96
  %v98 = vpop.f32.mrf.mxu0
  %99 = vdwg.mxu0
  %v100 = vmul.f32 %v97, %v97
  %vm101 = vcmask 64512
  %v102 = vsel %vm101, %v100, 0.0
  %103 = vadd.xlane.f32.xlu0 %v102
  %v104 = vpop.xlane.xlu0 %103
  %v105 = vmul.f32 %v19, %v19
  %v107 = vlaneseq
  %v108 = vshrl.u32 %v107, 7
  %v109 = vsub.s32 0, %v108
  %v110 = vrot.slane %v24, %v109
  %v112 = vmul.f32 %v105, %v110
  %v113 = vsel %vm26, %v112, 0.0
  %114 = vadd.xlane.f32.xlu0 %v113
  %v115 = vpop.xlane.xlu0 %114
  %v117 = vlaneseq
  %v118 = vshrl.u32 %v117, 7
  %v119 = vsub.s32 0, %v118
  %v120 = vrot.slane %v25, %v119
  %121 = vrot.lane.b32.xlu0 %v120, 8
  %v122 = vpop.permute.xlu0 %121
  %v124 = vadd.f32 %v97, %v122
  %v125 = vsub.f32 %v104, %v115
  %v126 = vmul.f32 %v125, 0.5
  %v127 = vadd.f32 %v126, %v124
  %129 = vrot.lane.b32.xlu0 %v127, 120
  %v130 = vpop.permute.xlu0 %129
  %vm132 = vcmask 7168
  %133 = vst.msk [vmem:[%s4] sm:$0xff] %vm132, %v130
  // Predicated region
  $region18: #{tpu_custom_call.1} parent=0 // pred_check
    _
  $region19: #{tpu_custom_call.1} parent=0 // pred_check_branch
    %135 = sbr.rel (0) target = $region21
  $region20: #{tpu_custom_call.1} parent=0 // pred_region
    _
  $region21: #{tpu_custom_call.1} parent=0 // pred_fallthru
    _
  // Predicated region
  $region22: #{tpu_custom_call.1} parent=0 // pred_check
    _
  $region23: #{tpu_custom_call.1} parent=0 // pred_check_branch
    %137 = sbr.rel (0) target = $region25
  $region24: #{tpu_custom_call.1} parent=0 // pred_region
    _
  $region25: #{tpu_custom_call.1} parent=0 // pred_fallthru
    _

</llo_original>
